<compile_context>
chip_gen: v7x
topology: tpu7x:2x2x1
jax: 0.10.0
libtpu: 0.0.40
codegen_flags: <defaults>
</compile_context>

<pallas_src>
import functools

import jax
import jax.numpy as jnp
from jax import lax
from jax.experimental import pallas as pl
from jax.experimental.pallas import tpu as pltpu


def _round_up(x, m):
    return (x + m - 1) // m * m


def _transr_kernel(rel_ref, h_ref, t_ref, w_ref, b_ref, out_ref, *, hidden_dim):
    """One tile of TransR scores.

    rel_ref : (TN, 1)        int32    relation id per edge
    h_ref   : (TN, E)        f32/bf16 gathered head embeddings
    t_ref   : (TN, E)        f32/bf16 gathered tail embeddings
    w_ref   : (E, R*H)       f32      fused projection table, W[e, r*H+j] = M_r[j, e]
    b_ref   : (1, R*H)       f32      fused relation bias, b[0, r*H+j] = rel_emb[r, j]
    out_ref : (TN//128, 128) f32      lane-dense scores, out[g, s] = score(edge g*128 + s)
    """
    tn = h_ref.shape[0]
    rh = w_ref.shape[1]

    # M_r (h - t) == M_r h - M_r t : project the difference once (widen to f32 first).
    d = h_ref[...].astype(jnp.float32) - t_ref[...].astype(jnp.float32)      # (TN, E)

    # One lane-filling MXU matmul against all relations at once, plus the fused
    # per-relation bias (the relation embedding r), broadcast over rows.
    proj = jnp.dot(d, w_ref[...], preferred_element_type=jnp.float32)        # (TN, R*H)
    diff = proj + b_ref[...]
    sq = diff * diff

    # Select this edge's relation block with a lane-range mask fused into the reduce
    # (no per-relation loop, no integer division: rel*H <= lane < rel*H + H).
    rel = rel_ref[...]                                                       # (TN, 1)
    lo = rel * hidden_dim
    hi = lo + hidden_dim
    lane = lax.broadcasted_iota(jnp.int32, (tn, rh), 1)
    sel = jnp.where((lane >= lo) & (lane < hi), sq, 0.0)

    # Reduce along lanes and emit a lane-dense (TN//128, 128) score slab.
    ssq = jnp.sum(sel.reshape(tn // 128, 128, rh), axis=-1)                  # (TN//128, 128)
    out_ref[...] = jnp.sqrt(ssq).astype(out_ref.dtype)


def transr_forward_pallas(h, t, rel_ids, rel_emb, transfer_flat, *,
                          tile_n=2048, input_dtype=jnp.float32):
    """h, t: (N, E); rel_ids: (N,) int; rel_emb: (R, H); transfer_flat: (R, H*E) -> scores (N,)."""
    N, E = h.shape
    R, H = rel_emb.shape
    RH = R * H

    # Fused, resident tables (a few KiB -- read once, stay in VMEM).
    #   W_wide[e, r*H + j] = M_r[j, e]    so   (d @ W_wide)[n, r*H + j] = (M_r d_n)[j]
    #   bias  [0, r*H + j] = rel_emb[r, j]
    table_he = transfer_flat.reshape(R, H, E).astype(jnp.float32)            # module layout (R, H, E)
    w_wide = jnp.transpose(table_he, (2, 0, 1)).reshape(E, RH)
    bias_wide = rel_emb.astype(jnp.float32).reshape(1, RH)

    # Tile size: multiple of 128, capped by the (row-padded) problem size.
    tile_n = max(128, min(int(tile_n), _round_up(N, 128)))
    tile_n = _round_up(tile_n, 128)
    n_pad = _round_up(N, tile_n)
    grid = (n_pad // tile_n,)

    def pad_rows(x, rows, dtype):
        x = x.astype(dtype)
        if x.shape[0] == rows:
            return x
        return jnp.pad(x, ((0, rows - x.shape[0]), (0, 0)))

    h_p = pad_rows(h, n_pad, input_dtype)
    t_p = pad_rows(t, n_pad, input_dtype)
    rel_p = pad_rows(rel_ids.reshape(N, 1).astype(jnp.int32), n_pad, jnp.int32)

    kernel = functools.partial(_transr_kernel, hidden_dim=H)

    out = pl.pallas_call(
        kernel,
        out_shape=jax.ShapeDtypeStruct((n_pad // 128, 128), jnp.float32),
        grid_spec=pltpu.PrefetchScalarGridSpec(
            num_scalar_prefetch=0,
            grid=grid,
            in_specs=[
                pl.BlockSpec((tile_n, 1), lambda i: (i, 0)),       # relation ids
                pl.BlockSpec((tile_n, E), lambda i: (i, 0)),       # h
                pl.BlockSpec((tile_n, E), lambda i: (i, 0)),       # t
                pl.BlockSpec((E, RH), lambda i: (0, 0)),           # fused projection table (resident)
                pl.BlockSpec((1, RH), lambda i: (0, 0)),           # fused relation bias (resident)
            ],
            out_specs=pl.BlockSpec((tile_n // 128, 128), lambda i: (i, 0)),
        ),
        compiler_params=pltpu.CompilerParams(
            dimension_semantics=("parallel",),
            vmem_limit_bytes=32 * 1024 * 1024),
    )(rel_p, h_p, t_p, w_wide, bias_wide)

    return out.reshape(-1)[:N]


def transr_forward_reference(h, t, r, rel_ids, transfer_flat, hidden_dim):
    E = h.shape[1]
    m = transfer_flat.reshape(-1, hidden_dim, E)[rel_ids]                    # (N, H, E)
    hp = jnp.einsum("nhe,ne->nh", m, h, precision=lax.Precision.HIGHEST)
    tp = jnp.einsum("nhe,ne->nh", m, t, precision=lax.Precision.HIGHEST)
    return jnp.linalg.norm(hp + r - tp, ord=2, axis=-1)


def make_params(key, entity_num, relation_num, E, H):
    k_ent, k_rel = jax.random.split(key)
    # ent_embeddings: default nn.Embedding init ~ N(0, 1)
    ent_emb = jax.random.normal(k_ent, (entity_num, E), dtype=jnp.float32)
    # rel_embeddings: xavier_uniform_
    bound = jnp.sqrt(6.0 / (relation_num + H))
    rel_emb = jax.random.uniform(k_rel, (relation_num, H),
                                 minval=-bound, maxval=bound, dtype=jnp.float32)
    # transfer_matrix: every relation gets the (H, E) "identity" matrix, flattened.
    identity = jnp.zeros((H, E), dtype=jnp.float32)
    diag = min(H, E)
    identity = identity.at[jnp.arange(diag), jnp.arange(diag)].set(1.0)
    transfer = jnp.tile(identity.reshape(1, H * E), (relation_num, 1))
    return ent_emb, rel_emb, transfer


if __name__ == "__main__":
    # small config consistent with the module
    config = dict(entity_num=64, relation_num=8,
                  entity_embedding_dim=32, interaction_hidden_embedding_dim=16)
    E = config["entity_embedding_dim"]
    H = config["interaction_hidden_embedding_dim"]
    R = config["relation_num"]

    key = jax.random.PRNGKey(0)
    k_params, k_idx, k_val, k_idx2, k_val2, k_tr2 = jax.random.split(key, 6)
    ent_emb, rel_emb, transfer = make_params(k_params, config["entity_num"], R, E, H)

    # ---- case 1: module-sized demo (N=8 edges, identity transfer matrices) ----
    N = 8
    indices = jax.random.randint(k_idx, (2, N), 0, config["entity_num"])
    values = jax.random.randint(k_val, (N,), 0, R)

    # embedding-table gathers (glue, plain JAX) -- the sparse_tensor indexing
    h = ent_emb[indices[0]]                       # (N, E)
    t = ent_emb[indices[1]]                       # (N, E)
    r = rel_emb[values]                           # (N, H)  (reference only; kernel folds it in)

    score = transr_forward_pallas(h, t, values, rel_emb, transfer)
    score = jax.block_until_ready(score)
    ref = transr_forward_reference(h, t, r, values, transfer, H)
    assert score.shape == (N,)
    assert jnp.allclose(score, ref, rtol=1e-5, atol=1e-5), (score, ref)

    # ---- case 2: multi-tile grid, random (non-identity) projections ----
    N2 = 4100                                     # pads to 3 grid steps at tile_n=2048
    transfer2 = jax.random.normal(k_tr2, (R, H * E), dtype=jnp.float32) / jnp.sqrt(E)
    indices2 = jax.random.randint(k_idx2, (2, N2), 0, config["entity_num"])
    values2 = jax.random.randint(k_val2, (N2,), 0, R)
    h2 = ent_emb[indices2[0]]
    t2 = ent_emb[indices2[1]]
    r2 = rel_emb[values2]
    ref2 = transr_forward_reference(h2, t2, r2, values2, transfer2, H)

    s2 = transr_forward_pallas(h2, t2, values2, rel_emb, transfer2, tile_n=2048)
    s2 = jax.block_until_ready(s2)
    assert s2.shape == (N2,)
    assert jnp.allclose(s2, ref2, rtol=2e-2, atol=2e-2), "f32 multi-tile mismatch"

    # bf16-streamed h/t (half the dominant HBM traffic); compute stays f32.
    s2_bf16 = transr_forward_pallas(h2, t2, values2, rel_emb, transfer2,
                                    tile_n=2048, input_dtype=jnp.bfloat16)
    s2_bf16 = jax.block_until_ready(s2_bf16)
    assert jnp.allclose(s2_bf16, ref2, rtol=5e-2, atol=5e-2), "bf16 multi-tile mismatch"

    print("KERNEL_OK")
</pallas_src>

<mosaic_0001>
module attributes {stable_mosaic.version = 11 : i64} {
  func.func @_transr_kernel(%arg0: i32, %arg1: memref<128x1xi32, #tpu.memory_space<vmem>>, %arg2: memref<128x32xf32, #tpu.memory_space<vmem>>, %arg3: memref<128x32xf32, #tpu.memory_space<vmem>>, %arg4: memref<32x128xf32, #tpu.memory_space<vmem>>, %arg5: memref<1x128xf32, #tpu.memory_space<vmem>>, %arg6: memref<1x128xf32, #tpu.memory_space<vmem>>) attributes {dimension_semantics = [#tpu.dimension_semantics<parallel>], iteration_bounds = array<i64: 1>, scalar_prefetch = 0 : i64, scratch_operands = 0 : i64, tpu.core_type = #tpu.core_type<tc>, window_params = [{transform_indices = @transform_0, window_bounds = array<i64: 128, 1>}, {transform_indices = @transform_1, window_bounds = array<i64: 128, 32>}, {transform_indices = @transform_2, window_bounds = array<i64: 128, 32>}, {pipeline_mode = #tpu.pipeline_mode<synchronous>, transform_indices = @transform_3, window_bounds = array<i64: 32, 128>}, {pipeline_mode = #tpu.pipeline_mode<synchronous>, transform_indices = @transform_4, window_bounds = array<i64: 1, 128>}, {transform_indices = @transform_5, window_bounds = array<i64: 1, 128>}]} {
    %c0 = arith.constant 0 : index
    %c0_0 = arith.constant 0 : index
    %0 = vector.load %arg2[%c0, %c0_0] : memref<128x32xf32, #tpu.memory_space<vmem>>, vector<128x32xf32>
    %c0_1 = arith.constant 0 : index
    %c0_2 = arith.constant 0 : index
    %1 = vector.load %arg3[%c0_1, %c0_2] : memref<128x32xf32, #tpu.memory_space<vmem>>, vector<128x32xf32>
    %2 = arith.subf %0, %1 : vector<128x32xf32>
    %c0_3 = arith.constant 0 : index
    %c0_4 = arith.constant 0 : index
    %3 = vector.load %arg4[%c0_3, %c0_4] : memref<32x128xf32, #tpu.memory_space<vmem>>, vector<32x128xf32>
    %cst = arith.constant dense<0.000000e+00> : vector<128x128xf32>
    %4 = tpu.matmul %2, %3, %cst {dimension_numbers = #tpu.dot_dimension_numbers<[1], [0], [0], [1], [0, 0, 1, 1], [], []>} : vector<128x32xf32>, vector<32x128xf32>, vector<128x128xf32> -> vector<128x128xf32>
    %c0_5 = arith.constant 0 : index
    %c0_6 = arith.constant 0 : index
    %5 = vector.load %arg5[%c0_5, %c0_6] : memref<1x128xf32, #tpu.memory_space<vmem>>, vector<1x128xf32>
    %6 = vector.broadcast %5 : vector<1x128xf32> to vector<128x128xf32>
    %7 = arith.addf %4, %6 : vector<128x128xf32>
    %8 = arith.mulf %7, %7 : vector<128x128xf32>
    %c0_7 = arith.constant 0 : index
    %c0_8 = arith.constant 0 : index
    %9 = vector.load %arg1[%c0_7, %c0_8] : memref<128x1xi32, #tpu.memory_space<vmem>>, vector<128x1xi32>
    %c16_i32 = arith.constant 16 : i32
    %10 = vector.broadcast %c16_i32 : i32 to vector<128x1xi32>
    %11 = arith.muli %9, %10 : vector<128x1xi32>
    %c16_i32_9 = arith.constant 16 : i32
    %12 = vector.broadcast %c16_i32_9 : i32 to vector<128x1xi32>
    %13 = arith.addi %11, %12 : vector<128x1xi32>
    %14 = tpu.iota {dimensions = array<i32: 1>} : vector<128x128xi32>
    %15 = vector.broadcast %11 : vector<128x1xi32> to vector<128x128xi32>
    %16 = arith.cmpi sge, %14, %15 : vector<128x128xi32>
    %17 = vector.broadcast %13 : vector<128x1xi32> to vector<128x128xi32>
    %18 = arith.cmpi slt, %14, %17 : vector<128x128xi32>
    %19 = arith.andi %16, %18 : vector<128x128xi1>
    %cst_10 = arith.constant 0.000000e+00 : f32
    %20 = vector.broadcast %cst_10 : f32 to vector<128x128xf32>
    %21 = arith.select %19, %8, %20 : vector<128x128xi1>, vector<128x128xf32>
    %22 = vector.shape_cast %21 : vector<128x128xf32> to vector<1x128x128xf32>
    %cst_11 = arith.constant dense<0.000000e+00> : vector<1x128xf32>
    %23 = vector.multi_reduction <add>, %22, %cst_11 [2] : vector<1x128x128xf32> to vector<1x128xf32>
    %24 = math.sqrt %23 : vector<1x128xf32>
    %c0_12 = arith.constant 0 : index
    %c0_13 = arith.constant 0 : index
    %25 = vector.load %arg6[%c0_12, %c0_13] : memref<1x128xf32, #tpu.memory_space<vmem>>, vector<1x128xf32>
    tpu.vector_store %arg6[%c0_12, %c0_13], %24 {strides = array<i32>} : memref<1x128xf32, #tpu.memory_space<vmem>>, vector<1x128xf32>,
    return
  }
  func.func @transform_0(%arg0: i32) -> (i32, i32) {
    %c0_i32 = arith.constant 0 : i32
    %c0_i32_0 = arith.constant 0 : i32
    return %arg0, %c0_i32 : i32, i32
  }
  func.func @transform_1(%arg0: i32) -> (i32, i32) {
    %c0_i32 = arith.constant 0 : i32
    %c0_i32_0 = arith.constant 0 : i32
    return %arg0, %c0_i32 : i32, i32
  }
  func.func @transform_2(%arg0: i32) -> (i32, i32) {
    %c0_i32 = arith.constant 0 : i32
    %c0_i32_0 = arith.constant 0 : i32
    return %arg0, %c0_i32 : i32, i32
  }
  func.func @transform_3(%arg0: i32) -> (i32, i32) {
    %c0_i32 = arith.constant 0 : i32
    %c0_i32_0 = arith.constant 0 : i32
    %c0_i32_1 = arith.constant 0 : i32
    return %c0_i32, %c0_i32_0 : i32, i32
  }
  func.func @transform_4(%arg0: i32) -> (i32, i32) {
    %c0_i32 = arith.constant 0 : i32
    %c0_i32_0 = arith.constant 0 : i32
    %c0_i32_1 = arith.constant 0 : i32
    return %c0_i32, %c0_i32_0 : i32, i32
  }
  func.func @transform_5(%arg0: i32) -> (i32, i32) {
    %c0_i32 = arith.constant 0 : i32
    %c0_i32_0 = arith.constant 0 : i32
    return %arg0, %c0_i32 : i32, i32
  }
}

</mosaic_0001>

<llo_original>
// kernel: tpu_custom_call.1
$region0: #{tpu_custom_call.1}
  #allocation0 [shape = 'u32[]', space=smem, size = 0x4, offset = 0x4, fixed_abs, tag = 'smem constant byte address 0x4 - core index']
  #allocation1 [shape = 'u32[144,128]{1,0:T(1,128)}', space=vmem, size = 0x12000, scoped, tag = 'internal scratch']
  %s0 = inlined_call_operand.vmem [shape: s32[128,1], index: 0, kind: input, shape index: {}]
  %s1 = inlined_call_operand.vmem [shape: f32[128,32], index: 1, kind: input, shape index: {}]
  %s2 = inlined_call_operand.vmem [shape: f32[128,32], index: 2, kind: input, shape index: {}]
  %s3 = inlined_call_operand.vmem [shape: f32[32,128], index: 3, kind: input, shape index: {}]
  %s4 = inlined_call_operand.vmem [shape: f32[1,128], index: 4, kind: input, shape index: {}]
  %s5 = inlined_call_operand.hbm [shape: f32[1,128], index: 5, kind: output, shape index: {}]
  %s6 = sld [smem:[#allocation0]]
  $region30: #{tpu_custom_call.1} parent=0
    _
  %s8 = ssub.s32 1, %s6
  %s9 = scalar_select 0, %s8, %s6
  $region1: #{tpu_custom_call.1} parent=0
    #allocation2 [shape = 'u8[512]{0}', space=vmem, size = 0x400, scoped, tag = 'output window, operand 0, single buffered']
    #allocation3 [shape = 's32[1]{0}', space=sflag, size = 0x4, scoped, tag = 'scoped memory for tpu_custom_call.1']
    %10 = vsyncpa [#allocation3], 0
    // Predicated region
    $region2: #{tpu_custom_call.1} parent=1 // pred_check
      _
    $region3: #{tpu_custom_call.1} parent=1 // pred_check_branch
      %12 = sbr.rel (0) target = $region5
    $region4: #{tpu_custom_call.1} parent=1 // pred_region
      _
    $region5: #{tpu_custom_call.1} parent=1 // pred_fallthru
      _
    // Predicated region
    $region6: #{tpu_custom_call.1} parent=1 // pred_check
      _
    $region7: #{tpu_custom_call.1} parent=1 // pred_check_branch
      %14 = sbr.rel (0) target = $region9
    $region8: #{tpu_custom_call.1} parent=1 // pred_region
      _
    $region9: #{tpu_custom_call.1} parent=1 // pred_fallthru
      _
    // Predicated region
    $region10: #{tpu_custom_call.1} parent=1 // pred_check
      _
    $region11: #{tpu_custom_call.1} parent=1 // pred_check_branch
      %16 = sbr.rel (0) target = $region13
    $region12: #{tpu_custom_call.1} parent=1 // pred_region
      _
    $region13: #{tpu_custom_call.1} parent=1 // pred_fallthru
      _
    // Predicated region
    $region14: #{tpu_custom_call.1} parent=1 // pred_check
      _
    $region15: #{tpu_custom_call.1} parent=1 // pred_check_branch
      %18 = sbr.rel (0) target = $region17
    $region16: #{tpu_custom_call.1} parent=1 // pred_region
      _
    $region17: #{tpu_custom_call.1} parent=1 // pred_fallthru
      _
    // Predicated region
    $region18: #{tpu_custom_call.1} parent=1 // pred_check
      _
    $region19: #{tpu_custom_call.1} parent=1 // pred_check_branch
      %20 = sbr.rel (0) target = $region21
    $region20: #{tpu_custom_call.1} parent=1 // pred_region
      _
    $region21: #{tpu_custom_call.1} parent=1 // pred_fallthru
      _
    %v21 = vld [vmem:[%s1] sm:$0xff]
    %v22 = vld [vmem:[%s1 + $0x8] sm:$0xff]
    %v23 = vld [vmem:[%s1 + $0x10] sm:$0xff]
    %v24 = vld [vmem:[%s1 + $0x18] sm:$0xff]
    %v25 = vld [vmem:[%s1 + $0x20] sm:$0xff]
    %v26 = vld [vmem:[%s1 + $0x28] sm:$0xff]
    %v27 = vld [vmem:[%s1 + $0x30] sm:$0xff]
    %v28 = vld [vmem:[%s1 + $0x38] sm:$0xff]
    %v29 = vld [vmem:[%s1 + $0x40] sm:$0xff]
    %v30 = vld [vmem:[%s1 + $0x48] sm:$0xff]
    %v31 = vld [vmem:[%s1 + $0x50] sm:$0xff]
    %v32 = vld [vmem:[%s1 + $0x58] sm:$0xff]
    %v33 = vld [vmem:[%s1 + $0x60] sm:$0xff]
    %v34 = vld [vmem:[%s1 + $0x68] sm:$0xff]
    %v35 = vld [vmem:[%s1 + $0x70] sm:$0xff]
    %v36 = vld [vmem:[%s1 + $0x78] sm:$0xff]
    %v37 = vld [vmem:[%s2] sm:$0xff]
    %v38 = vld [vmem:[%s2 + $0x8] sm:$0xff]
    %v39 = vld [vmem:[%s2 + $0x10] sm:$0xff]
    %v40 = vld [vmem:[%s2 + $0x18] sm:$0xff]
    %v41 = vld [vmem:[%s2 + $0x20] sm:$0xff]
    %v42 = vld [vmem:[%s2 + $0x28] sm:$0xff]
    %v43 = vld [vmem:[%s2 + $0x30] sm:$0xff]
    %v44 = vld [vmem:[%s2 + $0x38] sm:$0xff]
    %v45 = vld [vmem:[%s2 + $0x40] sm:$0xff]
    %v46 = vld [vmem:[%s2 + $0x48] sm:$0xff]
    %v47 = vld [vmem:[%s2 + $0x50] sm:$0xff]
    %v48 = vld [vmem:[%s2 + $0x58] sm:$0xff]
    %v49 = vld [vmem:[%s2 + $0x60] sm:$0xff]
    %v50 = vld [vmem:[%s2 + $0x68] sm:$0xff]
    %v51 = vld [vmem:[%s2 + $0x70] sm:$0xff]
    %v52 = vld [vmem:[%s2 + $0x78] sm:$0xff]
    %v53 = vsub.f32 %v21, %v37
    %v54 = vsub.f32 %v22, %v38
    %v55 = vsub.f32 %v23, %v39
    %v56 = vsub.f32 %v24, %v40
    %v57 = vsub.f32 %v25, %v41
    %v58 = vsub.f32 %v26, %v42
    %v59 = vsub.f32 %v27, %v43
    %v60 = vsub.f32 %v28, %v44
    %v61 = vsub.f32 %v29, %v45
    %v62 = vsub.f32 %v30, %v46
    %v63 = vsub.f32 %v31, %v47
    %v64 = vsub.f32 %v32, %v48
    %v65 = vsub.f32 %v33, %v49
    %v66 = vsub.f32 %v34, %v50
    %v67 = vsub.f32 %v35, %v51
    %v68 = vsub.f32 %v36, %v52
    %v69 = vld [vmem:[%s3] sm:$0xff]
    %v70 = vld [vmem:[%s3 + $0x8] sm:$0xff]
    %v71 = vld [vmem:[%s3 + $0x10] sm:$0xff]
    %v72 = vld [vmem:[%s3 + $0x18] sm:$0xff]
    %v73 = vld [vmem:[%s4] sm:$0x1]
    %v75 = vlaneseq
    %v76 = vshrl.u32 %v75, 7
    %v77 = vsub.s32 0, %v76
    %v78 = vrot.slane %v73, %v77
    %vm80 = vcmask 261120
    %v82 = vsel %vm80, %v53, 0
    %v85 = vsel %vm80, %v54, 0
    %v88 = vsel %vm80, %v55, 0
    %v91 = vsel %vm80, %v56, 0
    %v94 = vsel %vm80, %v57, 0
    %v97 = vsel %vm80, %v58, 0
    %v100 = vsel %vm80, %v59, 0
    %v103 = vsel %vm80, %v60, 0
    %v106 = vsel %vm80, %v61, 0
    %v109 = vsel %vm80, %v62, 0
    %v112 = vsel %vm80, %v63, 0
    %v115 = vsel %vm80, %v64, 0
    %v118 = vsel %vm80, %v65, 0
    %v121 = vsel %vm80, %v66, 0
    %v124 = vsel %vm80, %v67, 0
    %v127 = vsel %vm80, %v68, 0
    %129 = vmatprep.subr.mxu0 0.0
    %130 = vmatpush1.msra.mxu0 %v69
    %131 = vmatprep.subr.mxu0 0.0
    %132 = vmatpush1.msra.mxu0 %v70
    %133 = vmatprep.subr.mxu0 0.0
    %134 = vmatpush1.msra.mxu0 %v71
    %135 = vmatprep.subr.mxu0 0.0
    %136 = vmatpush1.msra.mxu0 %v72
    %137 = vmatprep.subr.mxu0 0.0
    %138 = vmatpush1.msra.mxu0 0.0
    %139 = vmatprep.subr.mxu0 0.0
    %140 = vmatpush1.msra.mxu0 0.0
    %141 = vmatprep.subr.mxu0 0.0
    %142 = vmatpush1.msra.mxu0 0.0
    %143 = vmatprep.subr.mxu0 0.0
    %144 = vmatpush1.msra.mxu0 0.0
    %145 = vmatprep.subr.mxu0 0.0
    %146 = vmatpush1.msra.mxu0 0.0
    %147 = vmatprep.subr.mxu0 0.0
    %148 = vmatpush1.msra.mxu0 0.0
    %149 = vmatprep.subr.mxu0 0.0
    %150 = vmatpush1.msra.mxu0 0.0
    %151 = vmatprep.subr.mxu0 0.0
    %152 = vmatpush1.msra.mxu0 0.0
    %153 = vmatprep.subr.mxu0 0.0
    %154 = vmatpush1.msra.mxu0 0.0
    %155 = vmatprep.subr.mxu0 0.0
    %156 = vmatpush1.msra.mxu0 0.0
    %157 = vmatprep.subr.mxu0 0.0
    %158 = vmatpush1.msra.mxu0 0.0
    %159 = vmatprep.subr.mxu0 0.0
    %160 = vmatpush1.msra.mxu0 0.0
    %161 = vmatprep.subr.mxu0 0.0
    %162 = vmatpush1.msra.mxu0 0.0
    %163 = vmatprep.subr.mxu0 0.0
    %164 = vmatpush1.msra.mxu0 0.0
    %165 = vmatprep.subr.mxu0 0.0
    %166 = vmatpush1.msra.mxu0 0.0
    %167 = vmatprep.subr.mxu0 0.0
    %168 = vmatpush1.msra.mxu0 0.0
    %169 = vmatprep.subr.mxu0 0.0
    %170 = vmatpush1.msra.mxu0 0.0
    %171 = vmatprep.subr.mxu0 0.0
    %172 = vmatpush1.msra.mxu0 0.0
    %173 = vmatprep.subr.mxu0 0.0
    %174 = vmatpush1.msra.mxu0 0.0
    %175 = vmatprep.subr.mxu0 0.0
    %176 = vmatpush1.msra.mxu0 0.0
    %177 = vmatprep.subr.mxu0 0.0
    %178 = vmatpush1.msra.mxu0 0.0
    %179 = vmatprep.subr.mxu0 0.0
    %180 = vmatpush1.msra.mxu0 0.0
    %181 = vmatprep.subr.mxu0 0.0
    %182 = vmatpush1.msra.mxu0 0.0
    %183 = vmatprep.subr.mxu0 0.0
    %184 = vmatpush1.msra.mxu0 0.0
    %185 = vmatprep.subr.mxu0 0.0
    %186 = vmatpush1.msra.mxu0 0.0
    %187 = vmatprep.subr.mxu0 0.0
    %188 = vmatpush1.msra.mxu0 0.0
    %189 = vmatprep.subr.mxu0 0.0
    %190 = vmatpush1.msra.mxu0 0.0
    %191 = vmatprep.subr.mxu0 0.0
    %192 = vmatpush1.msra.mxu0 0.0
    %193 = vmatprep.mubr.f32.mxu0 0.0
    %194 = vmatmul.mubr.f32.gmra.mrb[0].mxu0 %v82
    %v195 = vpop.f32.mrb[0].mxu0
    %v196 = vadd.f32 %v78, %v195
    %v197 = vpop.f32.mrb[0].mxu0
    %198 = vmatprep.mubr.f32.mxu0 0.0
    %199 = vmatmul.mubr.f32.gmra.mrb[0].mxu0 %v85
    %v200 = vpop.f32.mrb[0].mxu0
    %v201 = vadd.f32 %v78, %v200
    %v202 = vpop.f32.mrb[0].mxu0
    %203 = vmatprep.mubr.f32.mxu0 0.0
    %204 = vmatmul.mubr.f32.gmra.mrb[0].mxu0 %v88
    %v205 = vpop.f32.mrb[0].mxu0
    %v206 = vadd.f32 %v78, %v205
    %v207 = vpop.f32.mrb[0].mxu0
    %208 = vmatprep.mubr.f32.mxu0 0.0
    %209 = vmatmul.mubr.f32.gmra.mrb[0].mxu0 %v91
    %v210 = vpop.f32.mrb[0].mxu0
    %v211 = vadd.f32 %v78, %v210
    %v212 = vpop.f32.mrb[0].mxu0
    %213 = vmatprep.mubr.f32.mxu0 0.0
    %214 = vmatmul.mubr.f32.gmra.mrb[0].mxu0 %v94
    %v215 = vpop.f32.mrb[0].mxu0
    %v216 = vadd.f32 %v78, %v215
    %v217 = vpop.f32.mrb[0].mxu0
    %218 = vmatprep.mubr.f32.mxu0 0.0
    %219 = vmatmul.mubr.f32.gmra.mrb[0].mxu0 %v97
    %v220 = vpop.f32.mrb[0].mxu0
    %v221 = vadd.f32 %v78, %v220
    %v222 = vpop.f32.mrb[0].mxu0
    %223 = vmatprep.mubr.f32.mxu0 0.0
    %224 = vmatmul.mubr.f32.gmra.mrb[0].mxu0 %v100
    %v225 = vpop.f32.mrb[0].mxu0
    %v226 = vadd.f32 %v78, %v225
    %v227 = vpop.f32.mrb[0].mxu0
    %228 = vmatprep.mubr.f32.mxu0 0.0
    %229 = vmatmul.mubr.f32.gmra.mrb[0].mxu0 %v103
    %v230 = vpop.f32.mrb[0].mxu0
    %v231 = vadd.f32 %v78, %v230
    %v232 = vpop.f32.mrb[0].mxu0
    %233 = vmatprep.mubr.f32.mxu0 0.0
    %234 = vmatmul.mubr.f32.gmra.mrb[0].mxu0 %v106
    %v235 = vpop.f32.mrb[0].mxu0
    %v236 = vadd.f32 %v78, %v235
    %v237 = vpop.f32.mrb[0].mxu0
    %238 = vmatprep.mubr.f32.mxu0 0.0
    %239 = vmatmul.mubr.f32.gmra.mrb[0].mxu0 %v109
    %v240 = vpop.f32.mrb[0].mxu0
    %v241 = vadd.f32 %v78, %v240
    %v242 = vpop.f32.mrb[0].mxu0
    %243 = vmatprep.mubr.f32.mxu0 0.0
    %244 = vmatmul.mubr.f32.gmra.mrb[0].mxu0 %v112
    %v245 = vpop.f32.mrb[0].mxu0
    %v246 = vadd.f32 %v78, %v245
    %v247 = vpop.f32.mrb[0].mxu0
    %248 = vmatprep.mubr.f32.mxu0 0.0
    %249 = vmatmul.mubr.f32.gmra.mrb[0].mxu0 %v115
    %v250 = vpop.f32.mrb[0].mxu0
    %v251 = vadd.f32 %v78, %v250
    %v252 = vpop.f32.mrb[0].mxu0
    %253 = vmatprep.mubr.f32.mxu0 0.0
    %254 = vmatmul.mubr.f32.gmra.mrb[0].mxu0 %v118
    %v255 = vpop.f32.mrb[0].mxu0
    %v256 = vadd.f32 %v78, %v255
    %v257 = vpop.f32.mrb[0].mxu0
    %258 = vmatprep.mubr.f32.mxu0 0.0
    %259 = vmatmul.mubr.f32.gmra.mrb[0].mxu0 %v121
    %v260 = vpop.f32.mrb[0].mxu0
    %v261 = vadd.f32 %v78, %v260
    %v262 = vpop.f32.mrb[0].mxu0
    %263 = vmatprep.mubr.f32.mxu0 0.0
    %264 = vmatmul.mubr.f32.gmra.mrb[0].mxu0 %v124
    %v265 = vpop.f32.mrb[0].mxu0
    %v266 = vadd.f32 %v78, %v265
    %v267 = vpop.f32.mrb[0].mxu0
    %268 = vmatprep.mubr.f32.mxu0 0.0
    %269 = vmatmul.mubr.f32.gmra.mrb[0].mxu0 %v127
    %v270 = vpop.f32.mrb[0].mxu0
    %v271 = vadd.f32 %v78, %v270
    %v272 = vpop.f32.mrb[0].mxu0
    %273 = vdwg.mxu0
    %v274 = vmul.f32 %v196, %v196
    %v275 = vmul.f32 %v201, %v201
    %v276 = vmul.f32 %v206, %v206
    %v277 = vmul.f32 %v211, %v211
    %v278 = vmul.f32 %v216, %v216
    %v279 = vmul.f32 %v221, %v221
    %v280 = vmul.f32 %v226, %v226
    %v281 = vmul.f32 %v231, %v231
    %v282 = vmul.f32 %v236, %v236
    %v283 = vmul.f32 %v241, %v241
    %v284 = vmul.f32 %v246, %v246
    %v285 = vmul.f32 %v251, %v251
    %v286 = vmul.f32 %v256, %v256
    %v287 = vmul.f32 %v261, %v261
    %v288 = vmul.f32 %v266, %v266
    %v289 = vmul.f32 %v271, %v271
    %v290 = vld [vmem:[%s0] sm:$0xff]
    %v291 = vld [vmem:[%s0 + $0x8] sm:$0xff]
    %v292 = vld [vmem:[%s0 + $0x10] sm:$0xff]
    %v293 = vld [vmem:[%s0 + $0x18] sm:$0xff]
    %v294 = vld [vmem:[%s0 + $0x20] sm:$0xff]
    %v295 = vld [vmem:[%s0 + $0x28] sm:$0xff]
    %v296 = vld [vmem:[%s0 + $0x30] sm:$0xff]
    %v297 = vld [vmem:[%s0 + $0x38] sm:$0xff]
    %v298 = vld [vmem:[%s0 + $0x40] sm:$0xff]
    %v299 = vld [vmem:[%s0 + $0x48] sm:$0xff]
    %v300 = vld [vmem:[%s0 + $0x50] sm:$0xff]
    %v301 = vld [vmem:[%s0 + $0x58] sm:$0xff]
    %v302 = vld [vmem:[%s0 + $0x60] sm:$0xff]
    %v303 = vld [vmem:[%s0 + $0x68] sm:$0xff]
    %v304 = vld [vmem:[%s0 + $0x70] sm:$0xff]
    %v305 = vld [vmem:[%s0 + $0x78] sm:$0xff]
    %v306 = vmul.u32 %v290, 16
    %v307 = vmul.u32 %v291, 16
    %v308 = vmul.u32 %v292, 16
    %v309 = vmul.u32 %v293, 16
    %v310 = vmul.u32 %v294, 16
    %v311 = vmul.u32 %v295, 16
    %v312 = vmul.u32 %v296, 16
    %v313 = vmul.u32 %v297, 16
    %v314 = vmul.u32 %v298, 16
    %v315 = vmul.u32 %v299, 16
    %v316 = vmul.u32 %v300, 16
    %v317 = vmul.u32 %v301, 16
    %v318 = vmul.u32 %v302, 16
    %v319 = vmul.u32 %v303, 16
    %v320 = vmul.u32 %v304, 16
    %v321 = vmul.u32 %v305, 16
    %v322 = vadd.s32 %v306, 16
    %v323 = vadd.s32 %v307, 16
    %v324 = vadd.s32 %v308, 16
    %v325 = vadd.s32 %v309, 16
    %v326 = vadd.s32 %v310, 16
    %v327 = vadd.s32 %v311, 16
    %v328 = vadd.s32 %v312, 16
    %v329 = vadd.s32 %v313, 16
    %v330 = vadd.s32 %v314, 16
    %v331 = vadd.s32 %v315, 16
    %v332 = vadd.s32 %v316, 16
    %v333 = vadd.s32 %v317, 16
    %v334 = vadd.s32 %v318, 16
    %v335 = vadd.s32 %v319, 16
    %v336 = vadd.s32 %v320, 16
    %v337 = vadd.s32 %v321, 16
    %v338 = vlaneseq
    %v339 = vand.u32 %v338, 127
    %340 = vset.pattern.permute.xlu0 0
    %341 = vperm.xlu0 %340, %v306
    %v342 = vpop.permute.xlu0 %341
    %343 = vset.pattern.permute.xlu0 0
    %344 = vperm.xlu0 %343, %v307
    %v345 = vpop.permute.xlu0 %344
    %346 = vset.pattern.permute.xlu0 0
    %347 = vperm.xlu0 %346, %v308
    %v348 = vpop.permute.xlu0 %347
    %349 = vset.pattern.permute.xlu0 0
    %350 = vperm.xlu0 %349, %v309
    %v351 = vpop.permute.xlu0 %350
    %352 = vset.pattern.permute.xlu0 0
    %353 = vperm.xlu0 %352, %v310
    %v354 = vpop.permute.xlu0 %353
    %355 = vset.pattern.permute.xlu0 0
    %356 = vperm.xlu0 %355, %v311
    %v357 = vpop.permute.xlu0 %356
    %358 = vset.pattern.permute.xlu0 0
    %359 = vperm.xlu0 %358, %v312
    %v360 = vpop.permute.xlu0 %359
    %361 = vset.pattern.permute.xlu0 0
    %362 = vperm.xlu0 %361, %v313
    %v363 = vpop.permute.xlu0 %362
    %364 = vset.pattern.permute.xlu0 0
    %365 = vperm.xlu0 %364, %v314
    %v366 = vpop.permute.xlu0 %365
    %367 = vset.pattern.permute.xlu0 0
    %368 = vperm.xlu0 %367, %v315
    %v369 = vpop.permute.xlu0 %368
    %370 = vset.pattern.permute.xlu0 0
    %371 = vperm.xlu0 %370, %v316
    %v372 = vpop.permute.xlu0 %371
    %373 = vset.pattern.permute.xlu0 0
    %374 = vperm.xlu0 %373, %v317
    %v375 = vpop.permute.xlu0 %374
    %376 = vset.pattern.permute.xlu0 0
    %377 = vperm.xlu0 %376, %v318
    %v378 = vpop.permute.xlu0 %377
    %379 = vset.pattern.permute.xlu0 0
    %380 = vperm.xlu0 %379, %v319
    %v381 = vpop.permute.xlu0 %380
    %382 = vset.pattern.permute.xlu0 0
    %383 = vperm.xlu0 %382, %v320
    %v384 = vpop.permute.xlu0 %383
    %385 = vset.pattern.permute.xlu0 0
    %386 = vperm.xlu0 %385, %v321
    %v387 = vpop.permute.xlu0 %386
    %vm388 = vcmp.ge.s32.totalorder %v339, %v342
    %vm389 = vcmp.ge.s32.totalorder %v339, %v345
    %vm390 = vcmp.ge.s32.totalorder %v339, %v348
    %vm391 = vcmp.ge.s32.totalorder %v339, %v351
    %vm392 = vcmp.ge.s32.totalorder %v339, %v354
    %vm393 = vcmp.ge.s32.totalorder %v339, %v357
    %vm394 = vcmp.ge.s32.totalorder %v339, %v360
    %vm395 = vcmp.ge.s32.totalorder %v339, %v363
    %vm396 = vcmp.ge.s32.totalorder %v339, %v366
    %vm397 = vcmp.ge.s32.totalorder %v339, %v369
    %vm398 = vcmp.ge.s32.totalorder %v339, %v372
    %vm399 = vcmp.ge.s32.totalorder %v339, %v375
    %vm400 = vcmp.ge.s32.totalorder %v339, %v378
    %vm401 = vcmp.ge.s32.totalorder %v339, %v381
    %vm402 = vcmp.ge.s32.totalorder %v339, %v384
    %vm403 = vcmp.ge.s32.totalorder %v339, %v387
    %404 = vset.pattern.permute.xlu0 0
    %405 = vperm.xlu0 %404, %v322
    %v406 = vpop.permute.xlu0 %405
    %407 = vset.pattern.permute.xlu0 0
    %408 = vperm.xlu0 %407, %v323
    %v409 = vpop.permute.xlu0 %408
    %410 = vset.pattern.permute.xlu0 0
    %411 = vperm.xlu0 %410, %v324
    %v412 = vpop.permute.xlu0 %411
    %413 = vset.pattern.permute.xlu0 0
    %414 = vperm.xlu0 %413, %v325
    %v415 = vpop.permute.xlu0 %414
    %416 = vset.pattern.permute.xlu0 0
    %417 = vperm.xlu0 %416, %v326
    %v418 = vpop.permute.xlu0 %417
    %419 = vset.pattern.permute.xlu0 0
    %420 = vperm.xlu0 %419, %v327
    %v421 = vpop.permute.xlu0 %420
    %422 = vset.pattern.permute.xlu0 0
    %423 = vperm.xlu0 %422, %v328
    %v424 = vpop.permute.xlu0 %423
    %425 = vset.pattern.permute.xlu0 0
    %426 = vperm.xlu0 %425, %v329
    %v427 = vpop.permute.xlu0 %426
    %428 = vset.pattern.permute.xlu0 0
    %429 = vperm.xlu0 %428, %v330
    %v430 = vpop.permute.xlu0 %429
    %431 = vset.pattern.permute.xlu0 0
    %432 = vperm.xlu0 %431, %v331
    %v433 = vpop.permute.xlu0 %432
    %434 = vset.pattern.permute.xlu0 0
    %435 = vperm.xlu0 %434, %v332
    %v436 = vpop.permute.xlu0 %435
    %437 = vset.pattern.permute.xlu0 0
    %438 = vperm.xlu0 %437, %v333
    %v439 = vpop.permute.xlu0 %438
    %440 = vset.pattern.permute.xlu0 0
    %441 = vperm.xlu0 %440, %v334
    %v442 = vpop.permute.xlu0 %441
    %443 = vset.pattern.permute.xlu0 0
    %444 = vperm.xlu0 %443, %v335
    %v445 = vpop.permute.xlu0 %444
    %446 = vset.pattern.permute.xlu0 0
    %447 = vperm.xlu0 %446, %v336
    %v448 = vpop.permute.xlu0 %447
    %449 = vset.pattern.permute.xlu0 0
    %450 = vperm.xlu0 %449, %v337
    %v451 = vpop.permute.xlu0 %450
    %vm452 = vcmp.lt.s32.totalorder %v339, %v406
    %vm453 = vcmp.lt.s32.totalorder %v339, %v409
    %vm454 = vcmp.lt.s32.totalorder %v339, %v412
    %vm455 = vcmp.lt.s32.totalorder %v339, %v415
    %vm456 = vcmp.lt.s32.totalorder %v339, %v418
    %vm457 = vcmp.lt.s32.totalorder %v339, %v421
    %vm458 = vcmp.lt.s32.totalorder %v339, %v424
    %vm459 = vcmp.lt.s32.totalorder %v339, %v427
    %vm460 = vcmp.lt.s32.totalorder %v339, %v430
    %vm461 = vcmp.lt.s32.totalorder %v339, %v433
    %vm462 = vcmp.lt.s32.totalorder %v339, %v436
    %vm463 = vcmp.lt.s32.totalorder %v339, %v439
    %vm464 = vcmp.lt.s32.totalorder %v339, %v442
    %vm465 = vcmp.lt.s32.totalorder %v339, %v445
    %vm466 = vcmp.lt.s32.totalorder %v339, %v448
    %vm467 = vcmp.lt.s32.totalorder %v339, %v451
    %vm468 = vmand %vm388, %vm452
    %vm469 = vmand %vm389, %vm453
    %vm470 = vmand %vm390, %vm454
    %vm471 = vmand %vm391, %vm455
    %vm472 = vmand %vm392, %vm456
    %vm473 = vmand %vm393, %vm457
    %vm474 = vmand %vm394, %vm458
    %vm475 = vmand %vm395, %vm459
    %vm476 = vmand %vm396, %vm460
    %vm477 = vmand %vm397, %vm461
    %vm478 = vmand %vm398, %vm462
    %vm479 = vmand %vm399, %vm463
    %vm480 = vmand %vm400, %vm464
    %vm481 = vmand %vm401, %vm465
    %vm482 = vmand %vm402, %vm466
    %vm483 = vmand %vm403, %vm467
    %v484 = vsel %vm468, %v274, 0.0
    %v485 = vsel %vm469, %v275, 0.0
    %v486 = vsel %vm470, %v276, 0.0
    %v487 = vsel %vm471, %v277, 0.0
    %v488 = vsel %vm472, %v278, 0.0
    %v489 = vsel %vm473, %v279, 0.0
    %v490 = vsel %vm474, %v280, 0.0
    %v491 = vsel %vm475, %v281, 0.0
    %v492 = vsel %vm476, %v282, 0.0
    %v493 = vsel %vm477, %v283, 0.0
    %v494 = vsel %vm478, %v284, 0.0
    %v495 = vsel %vm479, %v285, 0.0
    %v496 = vsel %vm480, %v286, 0.0
    %v497 = vsel %vm481, %v287, 0.0
    %v498 = vsel %vm482, %v288, 0.0
    %v499 = vsel %vm483, %v289, 0.0
    %500 = vadd.xlane.f32.xlu0 %v484
    %v501 = vpop.xlane.xlu0 %500
    %502 = vadd.xlane.f32.xlu0 %v485
    %v503 = vpop.xlane.xlu0 %502
    %504 = vadd.xlane.f32.xlu0 %v486
    %v505 = vpop.xlane.xlu0 %504
    %506 = vadd.xlane.f32.xlu0 %v487
    %v507 = vpop.xlane.xlu0 %506
    %508 = vadd.xlane.f32.xlu0 %v488
    %v509 = vpop.xlane.xlu0 %508
    %510 = vadd.xlane.f32.xlu0 %v489
    %v511 = vpop.xlane.xlu0 %510
    %512 = vadd.xlane.f32.xlu0 %v490
    %v513 = vpop.xlane.xlu0 %512
    %514 = vadd.xlane.f32.xlu0 %v491
    %v515 = vpop.xlane.xlu0 %514
    %516 = vadd.xlane.f32.xlu0 %v492
    %v517 = vpop.xlane.xlu0 %516
    %518 = vadd.xlane.f32.xlu0 %v493
    %v519 = vpop.xlane.xlu0 %518
    %520 = vadd.xlane.f32.xlu0 %v494
    %v521 = vpop.xlane.xlu0 %520
    %522 = vadd.xlane.f32.xlu0 %v495
    %v523 = vpop.xlane.xlu0 %522
    %524 = vadd.xlane.f32.xlu0 %v496
    %v525 = vpop.xlane.xlu0 %524
    %526 = vadd.xlane.f32.xlu0 %v497
    %v527 = vpop.xlane.xlu0 %526
    %528 = vadd.xlane.f32.xlu0 %v498
    %v529 = vpop.xlane.xlu0 %528
    %530 = vadd.xlane.f32.xlu0 %v499
    %v531 = vpop.xlane.xlu0 %530
    %v532 = vrsqrt.pop %v501
    %v533 = vmul.f32 %v501, %v532
    %vm534 = vcmp.eq.f32.partialorder %v501, inf
    %v535 = vsel %vm534, %v501, %v533
    %vm536 = vcmp.eq.f32.partialorder %v501, 0.0
    %v537 = vand.u32 %v501, 2147483648
    %v538 = vsel %vm536, %v537, %v535
    %v539 = vrsqrt.pop %v503
    %v540 = vmul.f32 %v503, %v539
    %vm541 = vcmp.eq.f32.partialorder %v503, inf
    %v542 = vsel %vm541, %v503, %v540
    %vm543 = vcmp.eq.f32.partialorder %v503, 0.0
    %v544 = vand.u32 %v503, 2147483648
    %v545 = vsel %vm543, %v544, %v542
    %v546 = vrsqrt.pop %v505
    %v547 = vmul.f32 %v505, %v546
    %vm548 = vcmp.eq.f32.partialorder %v505, inf
    %v549 = vsel %vm548, %v505, %v547
    %vm550 = vcmp.eq.f32.partialorder %v505, 0.0
    %v551 = vand.u32 %v505, 2147483648
    %v552 = vsel %vm550, %v551, %v549
    %v553 = vrsqrt.pop %v507
    %v554 = vmul.f32 %v507, %v553
    %vm555 = vcmp.eq.f32.partialorder %v507, inf
    %v556 = vsel %vm555, %v507, %v554
    %vm557 = vcmp.eq.f32.partialorder %v507, 0.0
    %v558 = vand.u32 %v507, 2147483648
    %v559 = vsel %vm557, %v558, %v556
    %v560 = vrsqrt.pop %v509
    %v561 = vmul.f32 %v509, %v560
    %vm562 = vcmp.eq.f32.partialorder %v509, inf
    %v563 = vsel %vm562, %v509, %v561
    %vm564 = vcmp.eq.f32.partialorder %v509, 0.0
    %v565 = vand.u32 %v509, 2147483648
    %v566 = vsel %vm564, %v565, %v563
    %v567 = vrsqrt.pop %v511
    %v568 = vmul.f32 %v511, %v567
    %vm569 = vcmp.eq.f32.partialorder %v511, inf
    %v570 = vsel %vm569, %v511, %v568
    %vm571 = vcmp.eq.f32.partialorder %v511, 0.0
    %v572 = vand.u32 %v511, 2147483648
    %v573 = vsel %vm571, %v572, %v570
    %v574 = vrsqrt.pop %v513
    %v575 = vmul.f32 %v513, %v574
    %vm576 = vcmp.eq.f32.partialorder %v513, inf
    %v577 = vsel %vm576, %v513, %v575
    %vm578 = vcmp.eq.f32.partialorder %v513, 0.0
    %v579 = vand.u32 %v513, 2147483648
    %v580 = vsel %vm578, %v579, %v577
    %v581 = vrsqrt.pop %v515
    %v582 = vmul.f32 %v515, %v581
    %vm583 = vcmp.eq.f32.partialorder %v515, inf
    %v584 = vsel %vm583, %v515, %v582
    %vm585 = vcmp.eq.f32.partialorder %v515, 0.0
    %v586 = vand.u32 %v515, 2147483648
    %v587 = vsel %vm585, %v586, %v584
    %v588 = vrsqrt.pop %v517
    %v589 = vmul.f32 %v517, %v588
    %vm590 = vcmp.eq.f32.partialorder %v517, inf
    %v591 = vsel %vm590, %v517, %v589
    %vm592 = vcmp.eq.f32.partialorder %v517, 0.0
    %v593 = vand.u32 %v517, 2147483648
    %v594 = vsel %vm592, %v593, %v591
    %v595 = vrsqrt.pop %v519
    %v596 = vmul.f32 %v519, %v595
    %vm597 = vcmp.eq.f32.partialorder %v519, inf
    %v598 = vsel %vm597, %v519, %v596
    %vm599 = vcmp.eq.f32.partialorder %v519, 0.0
    %v600 = vand.u32 %v519, 2147483648
    %v601 = vsel %vm599, %v600, %v598
    %v602 = vrsqrt.pop %v521
    %v603 = vmul.f32 %v521, %v602
    %vm604 = vcmp.eq.f32.partialorder %v521, inf
    %v605 = vsel %vm604, %v521, %v603
    %vm606 = vcmp.eq.f32.partialorder %v521, 0.0
    %v607 = vand.u32 %v521, 2147483648
    %v608 = vsel %vm606, %v607, %v605
    %v609 = vrsqrt.pop %v523
    %v610 = vmul.f32 %v523, %v609
    %vm611 = vcmp.eq.f32.partialorder %v523, inf
    %v612 = vsel %vm611, %v523, %v610
    %vm613 = vcmp.eq.f32.partialorder %v523, 0.0
    %v614 = vand.u32 %v523, 2147483648
    %v615 = vsel %vm613, %v614, %v612
    %v616 = vrsqrt.pop %v525
    %v617 = vmul.f32 %v525, %v616
    %vm618 = vcmp.eq.f32.partialorder %v525, inf
    %v619 = vsel %vm618, %v525, %v617
    %vm620 = vcmp.eq.f32.partialorder %v525, 0.0
    %v621 = vand.u32 %v525, 2147483648
    %v622 = vsel %vm620, %v621, %v619
    %v623 = vrsqrt.pop %v527
    %v624 = vmul.f32 %v527, %v623
    %vm625 = vcmp.eq.f32.partialorder %v527, inf
    %v626 = vsel %vm625, %v527, %v624
    %vm627 = vcmp.eq.f32.partialorder %v527, 0.0
    %v628 = vand.u32 %v527, 2147483648
    %v629 = vsel %vm627, %v628, %v626
    %v630 = vrsqrt.pop %v529
    %v631 = vmul.f32 %v529, %v630
    %vm632 = vcmp.eq.f32.partialorder %v529, inf
    %v633 = vsel %vm632, %v529, %v631
    %vm634 = vcmp.eq.f32.partialorder %v529, 0.0
    %v635 = vand.u32 %v529, 2147483648
    %v636 = vsel %vm634, %v635, %v633
    %v637 = vrsqrt.pop %v531
    %v638 = vmul.f32 %v531, %v637
    %vm639 = vcmp.eq.f32.partialorder %v531, inf
    %v640 = vsel %vm639, %v531, %v638
    %vm641 = vcmp.eq.f32.partialorder %v531, 0.0
    %v642 = vand.u32 %v531, 2147483648
    %v643 = vsel %vm641, %v642, %v640
    %v660 = vlaneseq
    %v661 = vshrl.u32 %v660, 7
    %v662 = vsub.s32 %v339, %v661
    %v663 = vrot.slane %v538, %v662
    %v664 = vadd.s32 %v339, 4294967288
    %v665 = vlaneseq
    %v666 = vshrl.u32 %v665, 7
    %v667 = vsub.s32 %v664, %v666
    %v668 = vrot.slane %v545, %v667
    %vm669 = vcmask 130112
    %v670 = vsel %vm669, %v668, %v663
    %v671 = vadd.s32 %v339, 4294967280
    %v672 = vlaneseq
    %v673 = vshrl.u32 %v672, 7
    %v674 = vsub.s32 %v671, %v673
    %v675 = vrot.slane %v552, %v674
    %vm676 = vcmask 195712
    %v677 = vsel %vm676, %v675, %v670
    %v678 = vadd.s32 %v339, 4294967272
    %v679 = vlaneseq
    %v680 = vshrl.u32 %v679, 7
    %v681 = vsub.s32 %v678, %v680
    %v682 = vrot.slane %v559, %v681
    %vm683 = vcmask 261312
    %v684 = vsel %vm683, %v682, %v677
    %v685 = vadd.s32 %v339, 4294967264
    %v686 = vlaneseq
    %v687 = vshrl.u32 %v686, 7
    %v688 = vsub.s32 %v685, %v687
    %v689 = vrot.slane %v566, %v688
    %vm690 = vcmask 326912
    %v691 = vsel %vm690, %v689, %v684
    %v692 = vadd.s32 %v339, 4294967256
    %v693 = vlaneseq
    %v694 = vshrl.u32 %v693, 7
    %v695 = vsub.s32 %v692, %v694
    %v696 = vrot.slane %v573, %v695
    %vm697 = vcmask 392512
    %v698 = vsel %vm697, %v696, %v691
    %v699 = vadd.s32 %v339, 4294967248
    %v700 = vlaneseq
    %v701 = vshrl.u32 %v700, 7
    %v702 = vsub.s32 %v699, %v701
    %v703 = vrot.slane %v580, %v702
    %vm704 = vcmask 458112
    %v705 = vsel %vm704, %v703, %v698
    %v706 = vadd.s32 %v339, 4294967240
    %v707 = vlaneseq
    %v708 = vshrl.u32 %v707, 7
    %v709 = vsub.s32 %v706, %v708
    %v710 = vrot.slane %v587, %v709
    %vm711 = vcmask 523712
    %v712 = vsel %vm711, %v710, %v705
    %v713 = vadd.s32 %v339, 4294967232
    %v714 = vlaneseq
    %v715 = vshrl.u32 %v714, 7
    %v716 = vsub.s32 %v713, %v715
    %v717 = vrot.slane %v594, %v716
    %vm718 = vcmask 589312
    %v719 = vsel %vm718, %v717, %v712
    %v720 = vadd.s32 %v339, 4294967224
    %v721 = vlaneseq
    %v722 = vshrl.u32 %v721, 7
    %v723 = vsub.s32 %v720, %v722
    %v724 = vrot.slane %v601, %v723
    %vm725 = vcmask 654912
    %v726 = vsel %vm725, %v724, %v719
    %v727 = vadd.s32 %v339, 4294967216
    %v728 = vlaneseq
    %v729 = vshrl.u32 %v728, 7
    %v730 = vsub.s32 %v727, %v729
    %v731 = vrot.slane %v608, %v730
    %vm732 = vcmask 720512
    %v733 = vsel %vm732, %v731, %v726
    %v734 = vadd.s32 %v339, 4294967208
    %v735 = vlaneseq
    %v736 = vshrl.u32 %v735, 7
    %v737 = vsub.s32 %v734, %v736
    %v738 = vrot.slane %v615, %v737
    %vm739 = vcmask 786112
    %v740 = vsel %vm739, %v738, %v733
    %v741 = vadd.s32 %v339, 4294967200
    %v742 = vlaneseq
    %v743 = vshrl.u32 %v742, 7
    %v744 = vsub.s32 %v741, %v743
    %v745 = vrot.slane %v622, %v744
    %vm746 = vcmask 851712
    %v747 = vsel %vm746, %v745, %v740
    %v748 = vadd.s32 %v339, 4294967192
    %v749 = vlaneseq
    %v750 = vshrl.u32 %v749, 7
    %v751 = vsub.s32 %v748, %v750
    %v752 = vrot.slane %v629, %v751
    %vm753 = vcmask 917312
    %v754 = vsel %vm753, %v752, %v747
    %v755 = vadd.s32 %v339, 4294967184
    %v756 = vlaneseq
    %v757 = vshrl.u32 %v756, 7
    %v758 = vsub.s32 %v755, %v757
    %v759 = vrot.slane %v636, %v758
    %vm760 = vcmask 982912
    %v761 = vsel %vm760, %v759, %v754
    %v762 = vadd.s32 %v339, 4294967176
    %v763 = vlaneseq
    %v764 = vshrl.u32 %v763, 7
    %v765 = vsub.s32 %v762, %v764
    %v766 = vrot.slane %v643, %v765
    %vm767 = vcmask 1048512
    %v768 = vsel %vm767, %v766, %v761
    %770 = vst [vmem:[#allocation2] sm:$0x1] %v768
    // Predicated region
    $region22: #{tpu_custom_call.1} parent=1 // pred_check
      _
    $region23: #{tpu_custom_call.1} parent=1 // pred_check_branch
      %772 = sbr.rel (0) target = $region25
    $region24: #{tpu_custom_call.1} parent=1 // pred_region
      %s774 = ssub.s32 16, 16
      %775 = vsyncadd [#allocation3], %s774
      %s777 = sshll.u32 [#allocation2], 4
      %s778 = int_to_ptr.vmem [resolvable:$true] %s777
      %780 = dma.vmem_to_hbm [thread:$0]  %s778, 16, %s5, [#allocation3]
    $region25: #{tpu_custom_call.1} parent=1 // pred_fallthru
      _
    // Predicated region
    $region26: #{tpu_custom_call.1} parent=1 // pred_check
      _
    $region27: #{tpu_custom_call.1} parent=1 // pred_check_branch
      %782 = sbr.rel (0) target = $region29
    $region28: #{tpu_custom_call.1} parent=1 // pred_region
      %783 = dma.done [#allocation3], 16
    $region29: #{tpu_custom_call.1} parent=1 // pred_fallthru
      _
    %784 = vsyncpa [#allocation3], 1

</llo_original>
